<compile_context>
chip_gen: v6e
topology: v6e:2x2x1
jax: 0.10.0
libtpu: 0.0.40
codegen_flags: <defaults>
</compile_context>

<pallas_src>
import jax
import jax.numpy as jnp
from jax.experimental import pallas as pl
from jax.experimental.pallas import tpu as pltpu

_VMEM_LIMIT_BYTES = 32 * 1024 * 1024
_BLOCK_TARGET_BYTES = 2 * 1024 * 1024   # ~2 MiB of f32 input per grid step


def _sobel_kernel(x_ref, o_ref):
    """x_ref: (B, H, Wp) block; o_ref: (B, H-2, Wout) block, Wout in {Wp, Wp-2}.

    Separable Sobel:
      vertical   : sy = r0 + 2*r1 + r2  (for gx),  dy = r0 - r2  (for gy)
      horizontal : gx[j] = sy[j+2] - sy[j]
                   gy[j] = dy[j] + 2*dy[j+1] + dy[j+2]
    Lane shifts use XLU rolls; wrap-around only pollutes the last 2 columns
    of each (packed) plane, which the valid conv drops anyway.
    """
    Ho = o_ref.shape[1]
    Wp = x_ref.shape[2]

    # Row-shifted views loaded straight from the ref (only Ho rows each).
    r0 = x_ref[:, 0:Ho, :].astype(jnp.float32)
    r1 = x_ref[:, 1:1 + Ho, :].astype(jnp.float32)
    r2 = x_ref[:, 2:2 + Ho, :].astype(jnp.float32)

    sy = (r0 + r2) + 2.0 * r1            # vertical [1, 2, 1]
    dy = r0 - r2                         # vertical [1, 0, -1]

    # roll(a, Wp-1) puts column j+1 at position j; roll(a, Wp-2) puts j+2.
    gx = pltpu.roll(sy, shift=Wp - 2, axis=2) - sy                 # [-1, 0, 1]
    gy = (dy
          + 2.0 * pltpu.roll(dy, shift=Wp - 1, axis=2)
          + pltpu.roll(dy, shift=Wp - 2, axis=2))                  # [1, 2, 1]

    res = jnp.abs(gx) + jnp.abs(gy)
    o_ref[...] = res[:, :, :o_ref.shape[2]].astype(o_ref.dtype)


def _pick_block(num_planes, plane_bytes):
    """Planes per grid step: big enough to amortize per-step overhead
    (~2 MiB of f32 input), small enough to keep >= 4 pipeline steps so both
    v7x TensorCores get balanced work and DMA/compute overlap."""
    b = max(1, _BLOCK_TARGET_BYTES // max(plane_bytes, 1))
    if num_planes >= 4:
        b = min(b, num_planes // 4)
    return max(1, min(b, num_planes))


def gradient_sobel32_pallas(x):
    """x: (N, C, H, W) -> |sobel_x(x)| + |sobel_y(x)|, shape (N, C, H-2, W-2)."""
    N, C, H, W = x.shape
    assert H >= 3 and W >= 3, "valid 3x3 conv needs H, W >= 3"
    Ho, Wo = H - 2, W - 2
    NC = N * C
    xf = x.reshape(NC, H, W)

    # Lane packing: for narrow planes (W << 128) pack k planes side by side
    # along the lane axis so each vreg row carries ~128 useful lanes.
    k = 1
    if W < 128:
        for d in range(max(1, 128 // W), 0, -1):
            if NC % d == 0:
                k = d
                break
    P = NC // k
    Wp = k * W
    if k > 1:
        xp = xf.reshape(P, k, H, W).transpose(0, 2, 1, 3).reshape(P, H, Wp)
    else:
        xp = xf

    # Output width: with no packing store Wo directly (no wrapper-side slice,
    # no extra HBM round trip); with packing store the full packed width and
    # drop the per-plane garbage columns while un-packing.
    Wout = Wp if k > 1 else Wo

    B = _pick_block(P, H * Wp * 4)          # 4 bytes: kernel computes in f32
    grid = (pl.cdiv(P, B),)

    out_full = pl.pallas_call(
        _sobel_kernel,
        out_shape=jax.ShapeDtypeStruct((P, Ho, Wout), x.dtype),
        grid=grid,
        in_specs=[pl.BlockSpec((B, H, Wp), lambda i: (i, 0, 0))],
        out_specs=pl.BlockSpec((B, Ho, Wout), lambda i: (i, 0, 0)),
        compiler_params=pltpu.CompilerParams(
            dimension_semantics=("parallel",),
            vmem_limit_bytes=_VMEM_LIMIT_BYTES),
    )(xp)

    if k > 1:
        out = out_full.reshape(P, Ho, k, W)[:, :, :, :Wo]
        out = out.transpose(0, 2, 1, 3).reshape(N, C, Ho, Wo)
    else:
        out = out_full.reshape(N, C, Ho, Wo)
    return out


def _reference(x):
    # Pure-JAX reference: two depthwise valid 3x3 convs via shifted adds.
    N, C, H, W = x.shape
    Ho, Wo = H - 2, W - 2
    k1 = jnp.array([[-1., 0., 1.], [-2., 0., 2.], [-1., 0., 1.]], jnp.float32)
    k2 = jnp.array([[1., 2., 1.], [0., 0., 0.], [-1., -2., -1.]], jnp.float32)
    xf = x.astype(jnp.float32)
    g1 = jnp.zeros((N, C, Ho, Wo), jnp.float32)
    g2 = jnp.zeros((N, C, Ho, Wo), jnp.float32)
    for di in range(3):
        for dj in range(3):
            patch = xf[:, :, di:di + Ho, dj:dj + Wo]
            g1 = g1 + k1[di, dj] * patch
            g2 = g2 + k2[di, dj] * patch
    return (jnp.abs(g1) + jnp.abs(g2)).astype(x.dtype)


if __name__ == "__main__":
    key = jax.random.PRNGKey(0)
    N, C, H, W = 2, 32, 16, 16            # matches gradient_sobel32(channels=32)
    x = jax.random.normal(key, (N, C, H, W), dtype=jnp.float32)

    out = gradient_sobel32_pallas(x)
    out = jax.block_until_ready(out)

    ref = _reference(x)
    assert out.shape == (N, C, H - 2, W - 2), out.shape
    assert jnp.allclose(out, ref, atol=1e-4, rtol=1e-4)

    print("KERNEL_OK")
</pallas_src>

<mosaic_0001>
module attributes {stable_mosaic.version = 11 : i64} {
  func.func @_sobel_kernel(%arg0: i32, %arg1: memref<2x16x128xf32, #tpu.memory_space<vmem>>, %arg2: memref<2x14x128xf32, #tpu.memory_space<vmem>>) attributes {dimension_semantics = [#tpu.dimension_semantics<parallel>], iteration_bounds = array<i64: 4>, scalar_prefetch = 0 : i64, scratch_operands = 0 : i64, tpu.core_type = #tpu.core_type<tc>, window_params = [{transform_indices = @transform_0, window_bounds = array<i64: 2, 16, 128>}, {transform_indices = @transform_1, window_bounds = array<i64: 2, 14, 128>}]} {
    %c0 = arith.constant 0 : index
    %c0_0 = arith.constant 0 : index
    %c0_1 = arith.constant 0 : index
    %0 = vector.load %arg1[%c0, %c0_0, %c0_1] : memref<2x16x128xf32, #tpu.memory_space<vmem>>, vector<2x14x128xf32>
    %c0_2 = arith.constant 0 : index
    %c1 = arith.constant 1 : index
    %c0_3 = arith.constant 0 : index
    %1 = vector.load %arg1[%c0_2, %c1, %c0_3] : memref<2x16x128xf32, #tpu.memory_space<vmem>>, vector<2x14x128xf32>
    %c0_4 = arith.constant 0 : index
    %c2 = arith.constant 2 : index
    %c0_5 = arith.constant 0 : index
    %2 = vector.load %arg1[%c0_4, %c2, %c0_5] : memref<2x16x128xf32, #tpu.memory_space<vmem>>, vector<2x14x128xf32>
    %3 = arith.addf %0, %2 : vector<2x14x128xf32>
    %cst = arith.constant 2.000000e+00 : f32
    %4 = vector.broadcast %cst : f32 to vector<2x14x128xf32>
    %5 = arith.mulf %4, %1 : vector<2x14x128xf32>
    %6 = arith.addf %3, %5 : vector<2x14x128xf32>
    %7 = arith.subf %0, %2 : vector<2x14x128xf32>
    %c126_i32 = arith.constant 126 : i32
    %8 = tpu.dynamic_rotate %6 by %c126_i32 dim 2 : vector<2x14x128xf32>, i32 -> vector<2x14x128xf32>
    %9 = arith.subf %8, %6 : vector<2x14x128xf32>
    %c127_i32 = arith.constant 127 : i32
    %10 = tpu.dynamic_rotate %7 by %c127_i32 dim 2 : vector<2x14x128xf32>, i32 -> vector<2x14x128xf32>
    %cst_6 = arith.constant 2.000000e+00 : f32
    %11 = vector.broadcast %cst_6 : f32 to vector<2x14x128xf32>
    %12 = arith.mulf %11, %10 : vector<2x14x128xf32>
    %13 = arith.addf %7, %12 : vector<2x14x128xf32>
    %c126_i32_7 = arith.constant 126 : i32
    %14 = tpu.dynamic_rotate %7 by %c126_i32_7 dim 2 : vector<2x14x128xf32>, i32 -> vector<2x14x128xf32>
    %15 = arith.addf %13, %14 : vector<2x14x128xf32>
    %16 = math.absf %9 : vector<2x14x128xf32>
    %17 = math.absf %15 : vector<2x14x128xf32>
    %18 = arith.addf %16, %17 : vector<2x14x128xf32>
    %c0_8 = arith.constant 0 : index
    %c0_9 = arith.constant 0 : index
    %c0_10 = arith.constant 0 : index
    %19 = vector.load %arg2[%c0_8, %c0_9, %c0_10] : memref<2x14x128xf32, #tpu.memory_space<vmem>>, vector<2x14x128xf32>
    tpu.vector_store %arg2[%c0_8, %c0_9, %c0_10], %18 {strides = array<i32>} : memref<2x14x128xf32, #tpu.memory_space<vmem>>, vector<2x14x128xf32>,
    return
  }
  func.func @transform_0(%arg0: i32) -> (i32, i32, i32) {
    %c0_i32 = arith.constant 0 : i32
    %c0_i32_0 = arith.constant 0 : i32
    %c0_i32_1 = arith.constant 0 : i32
    return %arg0, %c0_i32, %c0_i32_0 : i32, i32, i32
  }
  func.func @transform_1(%arg0: i32) -> (i32, i32, i32) {
    %c0_i32 = arith.constant 0 : i32
    %c0_i32_0 = arith.constant 0 : i32
    %c0_i32_1 = arith.constant 0 : i32
    return %arg0, %c0_i32, %c0_i32_0 : i32, i32, i32
  }
}

</mosaic_0001>

<llo_original>
// kernel: tpu_custom_call.1
$region0: #{tpu_custom_call.1}
  #allocation0 [shape = 'u32[]', space=smem, size = 0x4, offset = 0x4, fixed_abs, tag = 'smem constant byte address 0x4 - core index']
  #allocation1 [shape = 'u32[144,128]{1,0:T(1,128)}', space=vmem, size = 0x12000, scoped, tag = 'internal scratch']
  %s0 = inlined_call_operand.hbm [shape: f32[8,16,128], index: 0, kind: input, shape index: {}]
  %s1 = inlined_call_operand.vmem [shape: f32[8,14,128], index: 1, kind: output, shape index: {}]
  %s2 = sld [smem:[#allocation0]]
  $region41: #{tpu_custom_call.1} parent=0
    _
  %s4 = ssub.s32 1, %s2
  %s5 = scalar_select 0, %s4, %s2
  $region1: #{tpu_custom_call.1} parent=0
    #allocation2 [shape = 'u8[32768]{0}', space=vmem, size = 0x8000, scoped, tag = 'input window, operand 0']
    #allocation3 [shape = 's32[2]{0}', space=sflag, size = 0x8, scoped, tag = 'scoped memory for tpu_custom_call.1']
    %6 = vsyncpa [#allocation3], 0
    %s7 = scalar_lea.sflag [#allocation3], 1
    %8 = vsyncpa %s7, 0
    loop: start=0, step=1, limit=6
    $region2: #{tpu_custom_call.1} parent=1 // loop_pre_header
      _
    $region3: #{tpu_custom_call.1} parent=1 // loop_header
      %s10 = sphi 0, %s14
      %p11 = scmp.ge.s32.totalorder %s10, 6
      %s20 = sphi 0, %s22
      %s23 = sphi 0, %s20
      %s24 = sphi 0, %s23
      %s40 = sphi 0, %s24
      %s46 = sphi 0, %s48
      %s49 = sphi 0, %s46
      %s50 = sphi 0, %s49
      %s66 = sphi 0, %s50
    $region4: #{tpu_custom_call.1} parent=1 // loop_header_branch
      %13 = sbr.rel (%p11) target = $region8
    $region5: #{tpu_custom_call.1} parent=1 // loop_body
      %s15 = ssub.s32 %s10, 1
      %s16 = ssub.s32 %s10, 2
      %s17 = sadd.s32 %s10, 1
      %s18 = ssub.s32 %s10, %s17
      %p19 = scmp.eq.s32.totalorder %s18, 0
      %s21 = sadd.s32 %s20, 1
      %s22 = scalar_select %p19, %s20, %s21
      %p25 = pneg %p19
      %p26 = scmp.eq.s32.totalorder %s10, 3
      %p27 = por %p25, %p26
      %p28 = scmp.ne.s32.totalorder %s20, %s23
      %p29 = scmp.eq.s32.totalorder %s10, 0
      %p30 = por %p28, %p29
      %p31 = scmp.ne.s32.totalorder %s20, %s23
      %p32 = scmp.eq.s32.totalorder %s15, 3
      %p33 = por %p31, %p32
      %p34 = scmp.ne.s32.totalorder %s23, %s24
      %p35 = scmp.eq.s32.totalorder %s15, 0
      %p36 = por %p34, %p35
      %p37 = scmp.ne.s32.totalorder %s23, %s24
      %p38 = scmp.eq.s32.totalorder %s16, 3
      %p39 = por %p37, %p38
      %p41 = scmp.ne.s32.totalorder %s24, %s40
      %p42 = scmp.eq.s32.totalorder %s16, 0
      %p43 = por %p41, %p42
      %s44 = ssub.s32 %s10, %s17
      %p45 = scmp.eq.s32.totalorder %s44, 0
      %s47 = sadd.s32 %s46, 1
      %s48 = scalar_select %p45, %s46, %s47
      %p51 = pneg %p45
      %p52 = scmp.eq.s32.totalorder %s10, 3
      %p53 = por %p51, %p52
      %p54 = scmp.ne.s32.totalorder %s46, %s49
      %p55 = scmp.eq.s32.totalorder %s10, 0
      %p56 = por %p54, %p55
      %p57 = scmp.ne.s32.totalorder %s46, %s49
      %p58 = scmp.eq.s32.totalorder %s15, 3
      %p59 = por %p57, %p58
      %p60 = scmp.ne.s32.totalorder %s49, %s50
      %p61 = scmp.eq.s32.totalorder %s15, 0
      %p62 = por %p60, %p61
      %p63 = scmp.ne.s32.totalorder %s49, %s50
      %p64 = scmp.eq.s32.totalorder %s16, 3
      %p65 = por %p63, %p64
      %p67 = scmp.ne.s32.totalorder %s50, %s66
      %p68 = scmp.eq.s32.totalorder %s16, 0
      %p69 = por %p67, %p68
      %p70 = scmp.le.s32.totalorder 1, %s10
      %p71 = scmp.lt.s32.totalorder %s10, 5
      %p72 = pnand %p70, %p71
      %p73 = pneg %p72
      // Predicated region
      $region9: #{tpu_custom_call.1} parent=5 // pred_check
        _
      $region10: #{tpu_custom_call.1} parent=5 // pred_check_branch
        %75 = sbr.rel (%p72) target = $region12
      $region11: #{tpu_custom_call.1} parent=5 // pred_region
        %s76 = ssub.s32 %s10, 1
      $region12: #{tpu_custom_call.1} parent=5 // pred_fallthru
        _
      %p77 = scmp.lt.s32.totalorder %s10, 4
      // Predicated region
      $region13: #{tpu_custom_call.1} parent=5 // pred_check
        %p78 = pneg %p77
      $region14: #{tpu_custom_call.1} parent=5 // pred_check_branch
        %80 = sbr.rel (%p78) target = $region16
      $region15: #{tpu_custom_call.1} parent=5 // pred_region
        // Predicated region
        $region17: #{tpu_custom_call.1} parent=15 // pred_check
          %p81 = pneg %p30
        $region18: #{tpu_custom_call.1} parent=15 // pred_check_branch
          %83 = sbr.rel (%p81) target = $region20
        $region19: #{tpu_custom_call.1} parent=15 // pred_region
          %s84 = sand.u32 %s20, 1
          %s85 = scalar_lea.sflag [#allocation3], %s84
          %s86 = sand.u32 %s20, 1
          %s87 = smul.addr %s86, 32
          %s88 = scalar_lea.vmem [#allocation2], %s87
          %s89 = smul.u32 2, %s10
          %s91 = ssub.s32 512, 512
          %92 = vsyncadd %s85, %s91
          %s93 = smul.addr %s89, 2
          %s94 = smul.addr %s93, 128
          %s95 = scalar_lea.hbm %s0, %s94
          %s96 = sshll.u32 %s88, 4
          %s97 = int_to_ptr.vmem [resolvable:$true] %s96
          %102 = dma.hbm_to_vmem [thread:$0]  %s95, 512, %s97, %s85, 128, 128, 8
        $region20: #{tpu_custom_call.1} parent=15 // pred_fallthru
          _
      $region16: #{tpu_custom_call.1} parent=5 // pred_fallthru
        _
      %p103 = scmp.le.s32.totalorder 1, %s10
      %p104 = scmp.lt.s32.totalorder %s10, 5
      %p105 = pnand %p103, %p104
      %p106 = pneg %p105
      // Predicated region
      $region21: #{tpu_custom_call.1} parent=5 // pred_check
        _
      $region22: #{tpu_custom_call.1} parent=5 // pred_check_branch
        %108 = sbr.rel (%p105) target = $region24
      $region23: #{tpu_custom_call.1} parent=5 // pred_region
        %s109 = ssub.s32 %s10, 1
        %s110 = sand.u32 %s23, 1
        %s111 = scalar_lea.sflag [#allocation3], %s110
        %s112 = sand.u32 %s23, 1
        %s113 = smul.addr %s112, 32
        %s114 = scalar_lea.vmem [#allocation2], %s113
        // Predicated region
        $region25: #{tpu_custom_call.1} parent=23 // pred_check
          %p115 = pneg %p36
        $region26: #{tpu_custom_call.1} parent=23 // pred_check_branch
          %117 = sbr.rel (%p115) target = $region28
        $region27: #{tpu_custom_call.1} parent=23 // pred_region
          %118 = dma.done %s111, 512
        $region28: #{tpu_custom_call.1} parent=23 // pred_fallthru
          _
        %s119 = sand.u32 %s23, 1
        %s120 = scalar_lea.sflag [#allocation3], %s119
        %s121 = sand.u32 %s23, 1
        %s122 = smul.addr %s121, 32
        %s123 = scalar_lea.vmem [#allocation2], %s122
        %p124 = pneg %p36
        %p125 = pneg %p33
        %p126 = pneg %p62
        %p127 = pneg %p59
        %s128 = smul.u32 2, %s15
        %p129 = scmp.lt.s32.totalorder %s128, 7
        %s130 = scalar_select %p129, %s128, 7
        %s131 = smul.addr %s130, 2
        %s132 = smul.addr %s131, 8
        %s133 = scalar_lea.vmem %s1, %s132
        %s134 = smul.u32 2, %s15
        %s135 = smul.u32 2, %s15
        %p136 = scmp.lt.s32.totalorder %s135, 7
        %s137 = scalar_select %p136, %s135, 7
        %s138 = smul.addr %s137, 2
        %s139 = smul.addr %s138, 8
        %s140 = scalar_lea.vmem %s1, %s139
        %s141 = smul.u32 2, %s15
        %v142 = vld [vmem:[%s114] sm:$0xff]
        %v143 = vld [vmem:[%s114 + $0x8] sm:$0x3f]
        %v144 = vld [vmem:[%s114 + $0x10] sm:$0xff]
        %v145 = vld [vmem:[%s114 + $0x18] sm:$0x3f]
        %v146 = vld [vmem:[%s114 + $0x1] sm:$0xff]
        %v147 = vld [vmem:[%s114 + $0x9] sm:$0x3f]
        %v148 = vld [vmem:[%s114 + $0x11] sm:$0xff]
        %v149 = vld [vmem:[%s114 + $0x19] sm:$0x3f]
        %v150 = vld [vmem:[%s114 + $0x2] sm:$0xff]
        %v151 = vld [vmem:[%s114 + $0xa] sm:$0x3f]
        %v152 = vld [vmem:[%s114 + $0x12] sm:$0xff]
        %v153 = vld [vmem:[%s114 + $0x1a] sm:$0x3f]
        %v154 = vadd.f32 %v142, %v150
        %v155 = vadd.f32 %v143, %v151
        %v156 = vadd.f32 %v144, %v152
        %v157 = vadd.f32 %v145, %v153
        %v158 = vmul.f32 %v146, 2.0
        %v159 = vmul.f32 %v147, 2.0
        %v160 = vmul.f32 %v148, 2.0
        %v161 = vmul.f32 %v149, 2.0
        %v162 = vadd.f32 %v154, %v158
        %v163 = vadd.f32 %v155, %v159
        %v164 = vadd.f32 %v156, %v160
        %v165 = vadd.f32 %v157, %v161
        %v166 = vsub.f32 %v142, %v150
        %v167 = vsub.f32 %v143, %v151
        %v168 = vsub.f32 %v144, %v152
        %v169 = vsub.f32 %v145, %v153
        %170 = vrot.lane.b32.xlu0 %v162, 126
        %v171 = vpop.permute.xlu0 %170
        %172 = vrot.lane.b32.xlu0 %v163, 126
        %v173 = vpop.permute.xlu0 %172
        %174 = vrot.lane.b32.xlu0 %v164, 126
        %v175 = vpop.permute.xlu0 %174
        %176 = vrot.lane.b32.xlu0 %v165, 126
        %v177 = vpop.permute.xlu0 %176
        %v178 = vsub.f32 %v171, %v162
        %v179 = vsub.f32 %v173, %v163
        %v180 = vsub.f32 %v175, %v164
        %v181 = vsub.f32 %v177, %v165
        %182 = vrot.lane.b32.xlu0 %v166, 127
        %v183 = vpop.permute.xlu0 %182
        %184 = vrot.lane.b32.xlu0 %v167, 127
        %v185 = vpop.permute.xlu0 %184
        %186 = vrot.lane.b32.xlu0 %v168, 127
        %v187 = vpop.permute.xlu0 %186
        %188 = vrot.lane.b32.xlu0 %v169, 127
        %v189 = vpop.permute.xlu0 %188
        %v190 = vmul.f32 %v183, 2.0
        %v191 = vmul.f32 %v185, 2.0
        %v192 = vmul.f32 %v187, 2.0
        %v193 = vmul.f32 %v189, 2.0
        %v194 = vadd.f32 %v166, %v190
        %v195 = vadd.f32 %v167, %v191
        %v196 = vadd.f32 %v168, %v192
        %v197 = vadd.f32 %v169, %v193
        %198 = vrot.lane.b32.xlu0 %v166, 126
        %v199 = vpop.permute.xlu0 %198
        %200 = vrot.lane.b32.xlu0 %v167, 126
        %v201 = vpop.permute.xlu0 %200
        %202 = vrot.lane.b32.xlu0 %v168, 126
        %v203 = vpop.permute.xlu0 %202
        %204 = vrot.lane.b32.xlu0 %v169, 126
        %v205 = vpop.permute.xlu0 %204
        %v206 = vadd.f32 %v194, %v199
        %v207 = vadd.f32 %v195, %v201
        %v208 = vadd.f32 %v196, %v203
        %v209 = vadd.f32 %v197, %v205
        %v210 = vand.u32 2147483647, %v178
        %v211 = vand.u32 2147483647, %v179
        %v212 = vand.u32 2147483647, %v180
        %v213 = vand.u32 2147483647, %v181
        %v214 = vand.u32 2147483647, %v206
        %v215 = vand.u32 2147483647, %v207
        %v216 = vand.u32 2147483647, %v208
        %v217 = vand.u32 2147483647, %v209
        %v218 = vadd.f32 %v210, %v214
        %v219 = vadd.f32 %v211, %v215
        %v220 = vadd.f32 %v212, %v216
        %v221 = vadd.f32 %v213, %v217
        %222 = vst [vmem:[%s140] sm:$0xff] %v218
        %223 = vst [vmem:[%s140 + $0x8] sm:$0x3f] %v219
        %224 = vst [vmem:[%s140 + $0x10] sm:$0xff] %v220
        %225 = vst [vmem:[%s140 + $0x18] sm:$0x3f] %v221
        %s226 = smul.u32 2, %s15
        %p227 = scmp.lt.s32.totalorder %s226, 7
        %s228 = scalar_select %p227, %s226, 7
        %s229 = smul.addr %s228, 2
        %s230 = smul.addr %s229, 8
        %s231 = scalar_lea.vmem %s1, %s230
        // Predicated region
        $region29: #{tpu_custom_call.1} parent=23 // pred_check
          %p232 = pneg %p59
        $region30: #{tpu_custom_call.1} parent=23 // pred_check_branch
          %234 = sbr.rel (%p232) target = $region32
        $region31: #{tpu_custom_call.1} parent=23 // pred_region
          %s235 = smul.u32 2, %s15
        $region32: #{tpu_custom_call.1} parent=23 // pred_fallthru
          _
      $region24: #{tpu_custom_call.1} parent=5 // pred_fallthru
        _
      %p236 = scmp.le.s32.totalorder 2, %s10
      // Predicated region
      $region33: #{tpu_custom_call.1} parent=5 // pred_check
        %p237 = pneg %p236
      $region34: #{tpu_custom_call.1} parent=5 // pred_check_branch
        %239 = sbr.rel (%p237) target = $region36
      $region35: #{tpu_custom_call.1} parent=5 // pred_region
        %s240 = ssub.s32 %s10, 2
        // Predicated region
        $region37: #{tpu_custom_call.1} parent=35 // pred_check
          %p241 = pneg %p65
        $region38: #{tpu_custom_call.1} parent=35 // pred_check_branch
          %243 = sbr.rel (%p241) target = $region40
        $region39: #{tpu_custom_call.1} parent=35 // pred_region
          %s244 = smul.u32 2, %s16
          %p245 = scmp.lt.s32.totalorder %s244, 7
          %s246 = scalar_select %p245, %s244, 7
          %s247 = smul.addr %s246, 2
          %s248 = smul.addr %s247, 8
          %s249 = scalar_lea.vmem %s1, %s248
        $region40: #{tpu_custom_call.1} parent=35 // pred_fallthru
          _
      $region36: #{tpu_custom_call.1} parent=5 // pred_fallthru
        _
    $region6: #{tpu_custom_call.1} parent=1 // loop_footer
      %s14 = sadd.s32 1, %s10
    $region7: #{tpu_custom_call.1} parent=1 // loop_footer_branch
      %9 = sbr.rel target = $region3
    $region8: #{tpu_custom_call.1} parent=1 // loop_exit
      _
    %250 = vsyncpa [#allocation3], 1
    %s251 = scalar_lea.sflag [#allocation3], 1
    %252 = vsyncpa %s251, 1

</llo_original>
